<compile_context>
chip_gen: v7x
topology: tpu7x:2x2x1
jax: 0.10.0
libtpu: 0.0.40
codegen_flags: <defaults>
</compile_context>

<pallas_src>
import jax
import jax.numpy as jnp
import numpy as np
from jax.experimental import pallas as pl
from jax.experimental.pallas import tpu as pltpu

# ---------------------------------------------------------------- config ----
B, CIN, H, W = 2, 3, 32, 32          # small synthetic input (NCHW)
C_FEAT = 128                         # stand-in for classifier.in_features (2048 for b5)
N_CLASSES = 8
N_PAD = 128                          # lane-dense FC output width (slice :N_CLASSES outside)
KH = KW = 3
STRIDE = 2
PAD = 1
HO = (H + 2 * PAD - KH) // STRIDE + 1
WO = (W + 2 * PAD - KW) // STRIDE + 1
HW = HO * WO                         # spatial positions per batch
K_RAW = KH * KW * CIN                # 27
K_PAD = 32                           # contraction dim padded to a multiple of 8
TM = 128                             # spatial rows per grid step (multiple of 128)
assert HW % TM == 0
N_MT = HW // TM
BN_EPS = 1e-3                        # matches nn.BatchNorm1d(eps=0.001)


# --------------------------------------------------------------- kernel -----
def _fused_kernel(p_ref, w_ref, t0_ref, s1_ref, t1_ref, wfc_ref, bfc_ref,
                  feat_ref, pooled_ref, logits_ref, acc_ref):
    """Fused stem (conv-matmul + folded BN2d + SiLU) + head (pool + BN1d + FC).

    grid = (B, HW // TM); axis 0 "parallel", axis 1 "arbitrary" (pool reduction).
    """
    m = pl.program_id(1)

    # --- stem: bf16 MXU matmul (BN scale pre-folded into w), f32 accumulate ---
    y = jnp.dot(p_ref[0], w_ref[...], preferred_element_type=jnp.float32)  # (TM, C)
    y = y + t0_ref[...]                          # folded BN2d shift
    y = y * jax.nn.sigmoid(y)                    # SiLU (EUP), f32 epilogue

    # features written directly in NCHW layout: block (1, C_FEAT, TM)
    feat_ref[0] = y.T

    # --- global-average-pool accumulator (init on first spatial tile) ---
    @pl.when(m == 0)
    def _():
        acc_ref[...] = jnp.zeros_like(acc_ref)

    acc_ref[...] += jnp.sum(y, axis=0, keepdims=True)        # (1, C_FEAT)

    # --- head on last spatial tile: mean -> BatchNorm1d -> Linear ---
    @pl.when(m == pl.num_programs(1) - 1)
    def _():
        pooled = acc_ref[...] * jnp.float32(1.0 / HW)         # constant mul, no divide
        pooled_ref[0] = pooled
        bn = pooled * s1_ref[...] + t1_ref[...]               # BN1d folded to scale/shift
        logits_ref[0] = (
            jnp.dot(bn, wfc_ref[...], preferred_element_type=jnp.float32)
            + bfc_ref[...]
        )


# ------------------------------------------------------------- wrappers -----
def _fused_forward(patches_bf16, w_bf16, t0, s1, t1, wfc, bfc):
    flops = 2 * B * HW * K_PAD * C_FEAT + 2 * B * C_FEAT * N_PAD
    bytes_accessed = (
        patches_bf16.size * 2 + w_bf16.size * 2
        + (t0.size + s1.size + t1.size + wfc.size + bfc.size) * 4
        + B * C_FEAT * HW * 4 + B * C_FEAT * 4 + B * N_PAD * 4
    )
    return pl.pallas_call(
        _fused_kernel,
        out_shape=(
            jax.ShapeDtypeStruct((B, C_FEAT, HW), jnp.float32),   # features (NCHW, flat HW)
            jax.ShapeDtypeStruct((B, 1, C_FEAT), jnp.float32),    # pooled
            jax.ShapeDtypeStruct((B, 1, N_PAD), jnp.float32),     # logits (lane-padded)
        ),
        grid=(B, N_MT),
        in_specs=[
            pl.BlockSpec((1, TM, K_PAD), lambda b, m: (b, m, 0)),     # patches tile
            pl.BlockSpec((K_PAD, C_FEAT), lambda b, m: (0, 0)),       # folded conv weight
            pl.BlockSpec((1, C_FEAT), lambda b, m: (0, 0)),           # BN2d shift
            pl.BlockSpec((1, C_FEAT), lambda b, m: (0, 0)),           # BN1d scale
            pl.BlockSpec((1, C_FEAT), lambda b, m: (0, 0)),           # BN1d shift
            pl.BlockSpec((C_FEAT, N_PAD), lambda b, m: (0, 0)),       # FC weight (padded)
            pl.BlockSpec((1, N_PAD), lambda b, m: (0, 0)),            # FC bias (padded)
        ],
        out_specs=(
            pl.BlockSpec((1, C_FEAT, TM), lambda b, m: (b, 0, m)),    # features, NCHW
            pl.BlockSpec((1, 1, C_FEAT), lambda b, m: (b, 0, 0)),     # pooled (resident)
            pl.BlockSpec((1, 1, N_PAD), lambda b, m: (b, 0, 0)),      # logits (resident)
        ),
        scratch_shapes=[pltpu.VMEM((1, C_FEAT), jnp.float32)],        # pool-sum accumulator
        compiler_params=pltpu.CompilerParams(
            dimension_semantics=("parallel", "arbitrary")),
        cost_estimate=pl.CostEstimate(
            flops=flops,
            transcendentals=B * HW * C_FEAT,
            bytes_accessed=bytes_accessed),
    )(patches_bf16, w_bf16, t0, s1, t1, wfc, bfc)


def im2col(x_nhwc):
    """3x3 / stride-2 / pad-1 patch extraction, K padded 27->32 (glue, plain JAX)."""
    xp = jnp.pad(x_nhwc, ((0, 0), (PAD, PAD), (PAD, PAD), (0, 0)))
    cols = []
    for kh in range(KH):
        for kw in range(KW):
            cols.append(
                xp[:, kh: kh + STRIDE * HO: STRIDE, kw: kw + STRIDE * WO: STRIDE, :]
            )
    patches = jnp.concatenate(cols, axis=-1)                 # (B, HO, WO, 27)
    patches = patches.reshape(B, HW, K_RAW)
    return jnp.pad(patches, ((0, 0), (0, 0), (0, K_PAD - K_RAW)))


def efficientnet_3stage_forward(x, params):
    """Mirrors EfficientNet3Stage.forward -> (features, pooled_features, logits)."""
    (w_bf16, t0, s1, t1, wfc, bfc) = params
    x_nhwc = jnp.transpose(x, (0, 2, 3, 1))
    patches = im2col(x_nhwc).astype(jnp.bfloat16)            # bf16 MXU inputs (amp path)
    feat_flat, pooled3, logits3 = _fused_forward(patches, w_bf16, t0, s1, t1, wfc, bfc)
    features = feat_flat.reshape(B, C_FEAT, HO, WO)          # already NCHW; reshape is free
    pooled = pooled3.reshape(B, C_FEAT)
    logits = logits3.reshape(B, N_PAD)[:, :N_CLASSES]
    return features, pooled, logits


# -------------------------------------------------------- pure-JAX ref ------
def reference(x, raw):
    (w_conv, gamma0, beta0, rm0, rv0, gamma1, beta1, rm1, rv1, w_fc, b_fc) = raw
    x_nhwc = jnp.transpose(x, (0, 2, 3, 1))
    w_hwio = w_conv.reshape(KH, KW, CIN, C_FEAT)
    y = jax.lax.conv_general_dilated(
        x_nhwc, w_hwio, window_strides=(STRIDE, STRIDE),
        padding=((PAD, PAD), (PAD, PAD)),
        dimension_numbers=("NHWC", "HWIO", "NHWC"),
    )
    y = (y - rm0) / jnp.sqrt(rv0 + BN_EPS) * gamma0 + beta0
    y = y * jax.nn.sigmoid(y)
    features = jnp.transpose(y, (0, 3, 1, 2))
    pooled = jnp.mean(y, axis=(1, 2))
    bn = (pooled - rm1) / jnp.sqrt(rv1 + BN_EPS) * gamma1 + beta1
    logits = bn @ w_fc.T + b_fc
    return features, pooled, logits


# ------------------------------------------------------------------ main ----
if __name__ == "__main__":
    key = jax.random.PRNGKey(0)
    ks = jax.random.split(key, 12)

    x = jax.random.normal(ks[0], (B, CIN, H, W), jnp.float32)

    # backbone stem conv (no bias; followed by BN2d) + BN2d params
    w_conv = 0.1 * jax.random.normal(ks[1], (K_RAW, C_FEAT), jnp.float32)
    gamma0 = 1.0 + 0.1 * jax.random.normal(ks[2], (C_FEAT,), jnp.float32)
    beta0 = 0.1 * jax.random.normal(ks[3], (C_FEAT,), jnp.float32)
    rm0 = 0.1 * jax.random.normal(ks[4], (C_FEAT,), jnp.float32)
    rv0 = 1.0 + 0.1 * jax.random.uniform(ks[5], (C_FEAT,), jnp.float32)

    # classifier: BatchNorm1d(C_FEAT) (eval-mode, running stats) + Linear
    gamma1 = 1.0 + 0.1 * jax.random.normal(ks[6], (C_FEAT,), jnp.float32)
    beta1 = 0.1 * jax.random.normal(ks[7], (C_FEAT,), jnp.float32)
    rm1 = 0.1 * jax.random.normal(ks[8], (C_FEAT,), jnp.float32)
    rv1 = 1.0 + 0.1 * jax.random.uniform(ks[9], (C_FEAT,), jnp.float32)
    w_fc = 0.05 * jax.random.normal(ks[10], (N_CLASSES, C_FEAT), jnp.float32)
    b_fc = 0.01 * jax.random.normal(ks[11], (N_CLASSES,), jnp.float32)

    # ---- parameter prep (one-time folds, all outside the per-call path) ----
    s0 = gamma0 / jnp.sqrt(rv0 + BN_EPS)
    t0 = (beta0 - rm0 * s0)[None, :]                                  # BN2d shift
    w_folded = w_conv * s0[None, :]                                   # fold BN2d scale
    w_folded = jnp.pad(w_folded, ((0, K_PAD - K_RAW), (0, 0))).astype(jnp.bfloat16)

    s1v = gamma1 / jnp.sqrt(rv1 + BN_EPS)
    s1 = s1v[None, :]
    t1 = (beta1 - rm1 * s1v)[None, :]
    wfc = jnp.zeros((C_FEAT, N_PAD), jnp.float32).at[:, :N_CLASSES].set(w_fc.T)
    bfc = jnp.zeros((1, N_PAD), jnp.float32).at[0, :N_CLASSES].set(b_fc)

    params = (w_folded, t0, s1, t1, wfc, bfc)

    fwd = jax.jit(lambda xx: efficientnet_3stage_forward(xx, params))
    features, pooled, logits = jax.block_until_ready(fwd(x))

    # correctness check against a plain-f32 JAX reference.
    # tolerance covers the bf16 MXU inputs (autocast/amp-equivalent path).
    raw = (w_conv, gamma0, beta0, rm0, rv0, gamma1, beta1, rm1, rv1, w_fc, b_fc)
    f_ref, p_ref, l_ref = reference(x, raw)
    np.testing.assert_allclose(np.asarray(features), np.asarray(f_ref), rtol=2e-2, atol=2e-2)
    np.testing.assert_allclose(np.asarray(pooled), np.asarray(p_ref), rtol=2e-2, atol=2e-2)
    np.testing.assert_allclose(np.asarray(logits), np.asarray(l_ref), rtol=2e-2, atol=2e-2)

    assert features.shape == (B, C_FEAT, HO, WO)
    assert pooled.shape == (B, C_FEAT)
    assert logits.shape == (B, N_CLASSES)
    print("KERNEL_OK")
</pallas_src>

<mosaic_0001>
module attributes {stable_mosaic.version = 11 : i64} {
  func.func @_fused_kernel(%arg0: i32, %arg1: i32, %arg2: memref<1x128x32xbf16, #tpu.memory_space<vmem>>, %arg3: memref<32x128xbf16, #tpu.memory_space<vmem>>, %arg4: memref<1x128xf32, #tpu.memory_space<vmem>>, %arg5: memref<1x128xf32, #tpu.memory_space<vmem>>, %arg6: memref<1x128xf32, #tpu.memory_space<vmem>>, %arg7: memref<128x128xf32, #tpu.memory_space<vmem>>, %arg8: memref<1x128xf32, #tpu.memory_space<vmem>>, %arg9: memref<1x128x128xf32, #tpu.memory_space<vmem>>, %arg10: memref<1x1x128xf32, #tpu.memory_space<vmem>>, %arg11: memref<1x1x128xf32, #tpu.memory_space<vmem>>, %arg12: memref<1x128xf32, #tpu.memory_space<vmem>>) attributes {dimension_semantics = [#tpu.dimension_semantics<parallel>, #tpu.dimension_semantics<arbitrary>], iteration_bounds = array<i64: 2, 2>, scalar_prefetch = 0 : i64, scratch_operands = 1 : i64, tpu.core_type = #tpu.core_type<tc>, window_params = [{transform_indices = @transform_0, window_bounds = array<i64: 1, 128, 32>}, {pipeline_mode = #tpu.pipeline_mode<synchronous>, transform_indices = @transform_1, window_bounds = array<i64: 32, 128>}, {pipeline_mode = #tpu.pipeline_mode<synchronous>, transform_indices = @transform_2, window_bounds = array<i64: 1, 128>}, {pipeline_mode = #tpu.pipeline_mode<synchronous>, transform_indices = @transform_3, window_bounds = array<i64: 1, 128>}, {pipeline_mode = #tpu.pipeline_mode<synchronous>, transform_indices = @transform_4, window_bounds = array<i64: 1, 128>}, {pipeline_mode = #tpu.pipeline_mode<synchronous>, transform_indices = @transform_5, window_bounds = array<i64: 128, 128>}, {pipeline_mode = #tpu.pipeline_mode<synchronous>, transform_indices = @transform_6, window_bounds = array<i64: 1, 128>}, {transform_indices = @transform_7, window_bounds = array<i64: 1, 128, 128>}, {transform_indices = @transform_8, window_bounds = array<i64: 1, 1, 128>}, {transform_indices = @transform_9, window_bounds = array<i64: 1, 1, 128>}]} {
    %c0 = arith.constant 0 : index
    %c0_0 = arith.constant 0 : index
    %c0_1 = arith.constant 0 : index
    %0 = vector.load %arg2[%c0, %c0_0, %c0_1] : memref<1x128x32xbf16, #tpu.memory_space<vmem>>, vector<1x128x32xbf16>
    %1 = vector.shape_cast %0 : vector<1x128x32xbf16> to vector<128x32xbf16>
    %c0_2 = arith.constant 0 : index
    %c0_3 = arith.constant 0 : index
    %2 = vector.load %arg3[%c0_2, %c0_3] : memref<32x128xbf16, #tpu.memory_space<vmem>>, vector<32x128xbf16>
    %cst = arith.constant dense<0.000000e+00> : vector<128x128xf32>
    %3 = tpu.matmul %1, %2, %cst {dimension_numbers = #tpu.dot_dimension_numbers<[1], [0], [0], [1], [0, 0, 1, 1], [], []>} : vector<128x32xbf16>, vector<32x128xbf16>, vector<128x128xf32> -> vector<128x128xf32>
    %c0_4 = arith.constant 0 : index
    %c0_5 = arith.constant 0 : index
    %4 = vector.load %arg4[%c0_4, %c0_5] : memref<1x128xf32, #tpu.memory_space<vmem>>, vector<1x128xf32>
    %5 = vector.broadcast %4 : vector<1x128xf32> to vector<128x128xf32>
    %6 = arith.addf %3, %5 : vector<128x128xf32>
    %7 = arith.negf %6 : vector<128x128xf32>
    %8 = math.exp %7 : vector<128x128xf32>
    %cst_6 = arith.constant 1.000000e+00 : f32
    %9 = vector.broadcast %cst_6 : f32 to vector<128x128xf32>
    %10 = arith.addf %9, %8 : vector<128x128xf32>
    %11 = arith.divf %9, %10 : vector<128x128xf32>
    %12 = arith.mulf %6, %11 : vector<128x128xf32>
    %13 = tpu.transpose %12, [1, 0] : vector<128x128xf32> -> vector<128x128xf32>
    %c0_7 = arith.constant 0 : index
    %c0_8 = arith.constant 0 : index
    %c0_9 = arith.constant 0 : index
    %14 = vector.load %arg9[%c0_7, %c0_8, %c0_9] : memref<1x128x128xf32, #tpu.memory_space<vmem>>, vector<1x128x128xf32>
    %15 = vector.shape_cast %14 : vector<1x128x128xf32> to vector<128x128xf32>
    %16 = vector.shape_cast %13 : vector<128x128xf32> to vector<1x128x128xf32>
    tpu.vector_store %arg9[%c0_7, %c0_8, %c0_9], %16 {strides = array<i32>} : memref<1x128x128xf32, #tpu.memory_space<vmem>>, vector<1x128x128xf32>,
    %c0_i32 = arith.constant 0 : i32
    %17 = arith.cmpi eq, %arg1, %c0_i32 : i32
    %18 = arith.extui %17 : i1 to i32
    %c0_i32_10 = arith.constant 0 : i32
    %19 = arith.cmpi ne, %18, %c0_i32_10 : i32
    scf.if %19 {
      %cst_17 = arith.constant 0.000000e+00 : f32
      %28 = vector.broadcast %cst_17 : f32 to vector<1x128xf32>
      %c0_18 = arith.constant 0 : index
      %c0_19 = arith.constant 0 : index
      %29 = vector.load %arg12[%c0_18, %c0_19] : memref<1x128xf32, #tpu.memory_space<vmem>>, vector<1x128xf32>
      tpu.vector_store %arg12[%c0_18, %c0_19], %28 {strides = array<i32>} : memref<1x128xf32, #tpu.memory_space<vmem>>, vector<1x128xf32>,
    } else {
    }
    %c0_11 = arith.constant 0 : index
    %c0_12 = arith.constant 0 : index
    %20 = vector.load %arg12[%c0_11, %c0_12] : memref<1x128xf32, #tpu.memory_space<vmem>>, vector<1x128xf32>
    %cst_13 = arith.constant dense<0.000000e+00> : vector<128xf32>
    %21 = vector.multi_reduction <add>, %12, %cst_13 [0] : vector<128x128xf32> to vector<128xf32>
    %22 = vector.shape_cast %21 : vector<128xf32> to vector<1x128xf32>
    %23 = arith.addf %20, %22 : vector<1x128xf32>
    %c0_14 = arith.constant 0 : index
    %c0_15 = arith.constant 0 : index
    %24 = vector.load %arg12[%c0_14, %c0_15] : memref<1x128xf32, #tpu.memory_space<vmem>>, vector<1x128xf32>
    tpu.vector_store %arg12[%c0_14, %c0_15], %23 {strides = array<i32>} : memref<1x128xf32, #tpu.memory_space<vmem>>, vector<1x128xf32>,
    %c1_i32 = arith.constant 1 : i32
    %25 = arith.cmpi eq, %arg1, %c1_i32 : i32
    %26 = arith.extui %25 : i1 to i32
    %c0_i32_16 = arith.constant 0 : i32
    %27 = arith.cmpi ne, %26, %c0_i32_16 : i32
    scf.if %27 {
      %c0_17 = arith.constant 0 : index
      %c0_18 = arith.constant 0 : index
      %28 = vector.load %arg12[%c0_17, %c0_18] : memref<1x128xf32, #tpu.memory_space<vmem>>, vector<1x128xf32>
      %cst_19 = arith.constant 3.906250e-03 : f32
      %29 = vector.broadcast %cst_19 : f32 to vector<1x128xf32>
      %30 = arith.mulf %28, %29 : vector<1x128xf32>
      %c0_20 = arith.constant 0 : index
      %c0_21 = arith.constant 0 : index
      %c0_22 = arith.constant 0 : index
      %31 = vector.load %arg10[%c0_20, %c0_21, %c0_22] : memref<1x1x128xf32, #tpu.memory_space<vmem>>, vector<1x1x128xf32>
      %32 = vector.shape_cast %31 : vector<1x1x128xf32> to vector<1x128xf32>
      %33 = vector.shape_cast %30 : vector<1x128xf32> to vector<1x1x128xf32>
      tpu.vector_store %arg10[%c0_20, %c0_21, %c0_22], %33 {strides = array<i32>} : memref<1x1x128xf32, #tpu.memory_space<vmem>>, vector<1x1x128xf32>,
      %c0_23 = arith.constant 0 : index
      %c0_24 = arith.constant 0 : index
      %34 = vector.load %arg5[%c0_23, %c0_24] : memref<1x128xf32, #tpu.memory_space<vmem>>, vector<1x128xf32>
      %35 = arith.mulf %30, %34 : vector<1x128xf32>
      %c0_25 = arith.constant 0 : index
      %c0_26 = arith.constant 0 : index
      %36 = vector.load %arg6[%c0_25, %c0_26] : memref<1x128xf32, #tpu.memory_space<vmem>>, vector<1x128xf32>
      %37 = arith.addf %35, %36 : vector<1x128xf32>
      %c0_27 = arith.constant 0 : index
      %c0_28 = arith.constant 0 : index
      %38 = vector.load %arg7[%c0_27, %c0_28] : memref<128x128xf32, #tpu.memory_space<vmem>>, vector<128x128xf32>
      %cst_29 = arith.constant dense<0.000000e+00> : vector<1x128xf32>
      %39 = tpu.matmul %37, %38, %cst_29 {dimension_numbers = #tpu.dot_dimension_numbers<[1], [0], [0], [1], [0, 0, 1, 1], [], []>} : vector<1x128xf32>, vector<128x128xf32>, vector<1x128xf32> -> vector<1x128xf32>
      %c0_30 = arith.constant 0 : index
      %c0_31 = arith.constant 0 : index
      %40 = vector.load %arg8[%c0_30, %c0_31] : memref<1x128xf32, #tpu.memory_space<vmem>>, vector<1x128xf32>
      %41 = arith.addf %39, %40 : vector<1x128xf32>
      %c0_32 = arith.constant 0 : index
      %c0_33 = arith.constant 0 : index
      %c0_34 = arith.constant 0 : index
      %42 = vector.load %arg11[%c0_32, %c0_33, %c0_34] : memref<1x1x128xf32, #tpu.memory_space<vmem>>, vector<1x1x128xf32>
      %43 = vector.shape_cast %42 : vector<1x1x128xf32> to vector<1x128xf32>
      %44 = vector.shape_cast %41 : vector<1x128xf32> to vector<1x1x128xf32>
      tpu.vector_store %arg11[%c0_32, %c0_33, %c0_34], %44 {strides = array<i32>} : memref<1x1x128xf32, #tpu.memory_space<vmem>>, vector<1x1x128xf32>,
    } else {
    }
    return
  }
  func.func @transform_0(%arg0: i32, %arg1: i32) -> (i32, i32, i32) {
    %c0_i32 = arith.constant 0 : i32
    %c0_i32_0 = arith.constant 0 : i32
    return %arg0, %arg1, %c0_i32 : i32, i32, i32
  }
  func.func @transform_1(%arg0: i32, %arg1: i32) -> (i32, i32) {
    %c0_i32 = arith.constant 0 : i32
    %c0_i32_0 = arith.constant 0 : i32
    %c0_i32_1 = arith.constant 0 : i32
    return %c0_i32, %c0_i32_0 : i32, i32
  }
  func.func @transform_2(%arg0: i32, %arg1: i32) -> (i32, i32) {
    %c0_i32 = arith.constant 0 : i32
    %c0_i32_0 = arith.constant 0 : i32
    %c0_i32_1 = arith.constant 0 : i32
    return %c0_i32, %c0_i32_0 : i32, i32
  }
  func.func @transform_3(%arg0: i32, %arg1: i32) -> (i32, i32) {
    %c0_i32 = arith.constant 0 : i32
    %c0_i32_0 = arith.constant 0 : i32
    %c0_i32_1 = arith.constant 0 : i32
    return %c0_i32, %c0_i32_0 : i32, i32
  }
  func.func @transform_4(%arg0: i32, %arg1: i32) -> (i32, i32) {
    %c0_i32 = arith.constant 0 : i32
    %c0_i32_0 = arith.constant 0 : i32
    %c0_i32_1 = arith.constant 0 : i32
    return %c0_i32, %c0_i32_0 : i32, i32
  }
  func.func @transform_5(%arg0: i32, %arg1: i32) -> (i32, i32) {
    %c0_i32 = arith.constant 0 : i32
    %c0_i32_0 = arith.constant 0 : i32
    %c0_i32_1 = arith.constant 0 : i32
    return %c0_i32, %c0_i32_0 : i32, i32
  }
  func.func @transform_6(%arg0: i32, %arg1: i32) -> (i32, i32) {
    %c0_i32 = arith.constant 0 : i32
    %c0_i32_0 = arith.constant 0 : i32
    %c0_i32_1 = arith.constant 0 : i32
    return %c0_i32, %c0_i32_0 : i32, i32
  }
  func.func @transform_7(%arg0: i32, %arg1: i32) -> (i32, i32, i32) {
    %c0_i32 = arith.constant 0 : i32
    %c0_i32_0 = arith.constant 0 : i32
    return %arg0, %c0_i32, %arg1 : i32, i32, i32
  }
  func.func @transform_8(%arg0: i32, %arg1: i32) -> (i32, i32, i32) {
    %c0_i32 = arith.constant 0 : i32
    %c0_i32_0 = arith.constant 0 : i32
    %c0_i32_1 = arith.constant 0 : i32
    return %arg0, %c0_i32, %c0_i32_0 : i32, i32, i32
  }
  func.func @transform_9(%arg0: i32, %arg1: i32) -> (i32, i32, i32) {
    %c0_i32 = arith.constant 0 : i32
    %c0_i32_0 = arith.constant 0 : i32
    %c0_i32_1 = arith.constant 0 : i32
    return %arg0, %c0_i32, %c0_i32_0 : i32, i32, i32
  }
}

</mosaic_0001>

<llo_original>
// kernel: _lambda_.1
$region0: #{_lambda_.1}
  #allocation0 [shape = 'u32[]', space=smem, size = 0x4, offset = 0x4, fixed_abs, tag = 'smem constant byte address 0x4 - core index']
  #allocation1 [shape = 'u32[144,128]{1,0:T(1,128)}', space=vmem, size = 0x12000, scoped, tag = 'internal scratch']
  #allocation2 [shape = 'f32[1,128]{1,0:T(1,128)}', space=vmem, size = 0x200, scoped, tag = 'scratch operand']
  %s0 = inlined_call_operand.vmem [shape: bf16[2,256,32], index: 0, kind: input, shape index: {}]
  %s1 = inlined_call_operand.vmem [shape: bf16[32,128], index: 1, kind: input, shape index: {}]
  %s2 = inlined_call_operand.vmem [shape: f32[1,128], index: 2, kind: input, shape index: {}]
  %s3 = inlined_call_operand.vmem [shape: f32[1,128], index: 3, kind: input, shape index: {}]
  %s4 = inlined_call_operand.vmem [shape: f32[1,128], index: 4, kind: input, shape index: {}]
  %s5 = inlined_call_operand.vmem [shape: f32[128,128], index: 5, kind: input, shape index: {}]
  %s6 = inlined_call_operand.vmem [shape: f32[1,128], index: 6, kind: input, shape index: {}]
  %s7 = inlined_call_operand.vmem [shape: f32[2,128,256], index: 7, kind: output, shape index: {0}]
  %s8 = inlined_call_operand.hbm [shape: f32[2,1,128], index: 8, kind: output, shape index: {1}]
  %s9 = inlined_call_operand.hbm [shape: f32[2,1,128], index: 9, kind: output, shape index: {2}]
  %10 = xla_tuple %s7, %s8, %s9
  %s11 = sld [smem:[#allocation0]]
  $region119: #{_lambda_.1} parent=0
    _
  %s13 = ssub.s32 1, %s11
  %s14 = scalar_select 0, %s13, %s11
  $region1: #{_lambda_.1} parent=0
    #allocation3 [shape = 'u8[131072]{0}', space=vmem, size = 0x20000, scoped, tag = 'output window, operand 0']
    #allocation4 [shape = 'u8[1024]{0}', space=vmem, size = 0x400, scoped, tag = 'output window, operand 1']
    #allocation5 [shape = 's32[2]{0}', space=sflag, size = 0x8, scoped, tag = 'scoped memory for _lambda_.1']
    #allocation6 [shape = 'u8[1024]{0}', space=vmem, size = 0x400, scoped, tag = 'output window, operand 2']
    #allocation7 [shape = 's32[2]{0}', space=sflag, size = 0x8, scoped, tag = 'scoped memory for _lambda_.1']
    %15 = vsyncpa [#allocation5], 0
    %s16 = scalar_lea.sflag [#allocation5], 1
    %17 = vsyncpa %s16, 0
    %18 = vsyncpa [#allocation7], 0
    %s19 = scalar_lea.sflag [#allocation7], 1
    %20 = vsyncpa %s19, 0
    loop: start=0, step=1, limit=6
    $region2: #{_lambda_.1} parent=1 // loop_pre_header
      _
    $region3: #{_lambda_.1} parent=1 // loop_header
      %s22 = sphi 0, %s26
      %p23 = scmp.ge.s32.totalorder %s22, 6
      %s29 = sphi 0, %s41
      %s30 = sphi 0, %s37
      %s31 = sphi 0, %s29
      %s32 = sphi 0, %s30
      %s33 = sphi 0, %s31
      %s34 = sphi 0, %s32
      %s46 = sphi 0, %s48
      %s49 = sphi 0, %s46
      %s50 = sphi 0, %s49
      %s66 = sphi 0, %s50
      %s70 = sphi 0, %s70
      %s72 = sphi 0, %s70
      %s73 = sphi 0, %s72
      %s87 = sphi 0, %s73
      %s91 = sphi 0, %s91
      %s93 = sphi 0, %s91
      %s94 = sphi 0, %s93
      %s108 = sphi 0, %s94
      %s112 = sphi 0, %s112
      %s114 = sphi 0, %s112
      %s115 = sphi 0, %s114
      %s129 = sphi 0, %s115
      %s133 = sphi 0, %s133
      %s135 = sphi 0, %s133
      %s136 = sphi 0, %s135
      %s150 = sphi 0, %s136
      %s154 = sphi 0, %s154
      %s156 = sphi 0, %s154
      %s157 = sphi 0, %s156
      %s171 = sphi 0, %s157
      %s175 = sphi 0, %s175
      %s177 = sphi 0, %s175
      %s178 = sphi 0, %s177
      %s192 = sphi 0, %s178
      %s200 = sphi 0, %s202
      %s203 = sphi 0, %s200
      %s204 = sphi 0, %s203
      %s220 = sphi 0, %s204
      %s226 = sphi 0, %s228
      %s229 = sphi 0, %s226
      %s230 = sphi 0, %s229
      %s246 = sphi 0, %s230
      %s252 = sphi 0, %s254
      %s255 = sphi 0, %s252
      %s256 = sphi 0, %s255
      %s272 = sphi 0, %s256
    $region4: #{_lambda_.1} parent=1 // loop_header_branch
      %25 = sbr.rel (%p23) target = $region8
    $region5: #{_lambda_.1} parent=1 // loop_body
      %s27 = ssub.s32 %s22, 1
      %s28 = ssub.s32 %s22, 2
      %s35 = sadd.s32 1, %s30
      %p36 = scmp.ge.s32.totalorder %s35, 2
      %s37 = scalar_select %p36, 0, %s35
      %s38 = sadd.s32 1, %s29
      %s39 = scalar_select %p36, %s38, %s29
      %p40 = scmp.ge.s32.totalorder %s39, 2
      %s41 = scalar_select %p40, 0, %s39
      %s42 = ssub.s32 %s29, %s41
      %s43 = ssub.s32 %s30, %s37
      %s44 = sor.u32 %s42, %s43
      %p45 = scmp.eq.s32.totalorder %s44, 0
      %s47 = sadd.s32 %s46, 1
      %s48 = scalar_select %p45, %s46, %s47
      %p51 = pneg %p45
      %p52 = scmp.eq.s32.totalorder %s22, 3
      %p53 = por %p51, %p52
      %p54 = scmp.ne.s32.totalorder %s46, %s49
      %p55 = scmp.eq.s32.totalorder %s22, 0
      %p56 = por %p54, %p55
      %p57 = scmp.ne.s32.totalorder %s46, %s49
      %p58 = scmp.eq.s32.totalorder %s27, 3
      %p59 = por %p57, %p58
      %p60 = scmp.ne.s32.totalorder %s49, %s50
      %p61 = scmp.eq.s32.totalorder %s27, 0
      %p62 = por %p60, %p61
      %p63 = scmp.ne.s32.totalorder %s49, %s50
      %p64 = scmp.eq.s32.totalorder %s28, 3
      %p65 = por %p63, %p64
      %p67 = scmp.ne.s32.totalorder %s50, %s66
      %p68 = scmp.eq.s32.totalorder %s28, 0
      %p69 = por %p67, %p68
      %s71 = sadd.s32 %s70, 1
      %p74 = scmp.eq.s32.totalorder %s22, 3
      %p75 = scmp.ne.s32.totalorder %s70, %s72
      %p76 = scmp.eq.s32.totalorder %s22, 0
      %p77 = por %p75, %p76
      %p78 = scmp.ne.s32.totalorder %s70, %s72
      %p79 = scmp.eq.s32.totalorder %s27, 3
      %p80 = por %p78, %p79
      %p81 = scmp.ne.s32.totalorder %s72, %s73
      %p82 = scmp.eq.s32.totalorder %s27, 0
      %p83 = por %p81, %p82
      %p84 = scmp.ne.s32.totalorder %s72, %s73
      %p85 = scmp.eq.s32.totalorder %s28, 3
      %p86 = por %p84, %p85
      %p88 = scmp.ne.s32.totalorder %s73, %s87
      %p89 = scmp.eq.s32.totalorder %s28, 0
      %p90 = por %p88, %p89
      %s92 = sadd.s32 %s91, 1
      %p95 = scmp.eq.s32.totalorder %s22, 3
      %p96 = scmp.ne.s32.totalorder %s91, %s93
      %p97 = scmp.eq.s32.totalorder %s22, 0
      %p98 = por %p96, %p97
      %p99 = scmp.ne.s32.totalorder %s91, %s93
      %p100 = scmp.eq.s32.totalorder %s27, 3
      %p101 = por %p99, %p100
      %p102 = scmp.ne.s32.totalorder %s93, %s94
      %p103 = scmp.eq.s32.totalorder %s27, 0
      %p104 = por %p102, %p103
      %p105 = scmp.ne.s32.totalorder %s93, %s94
      %p106 = scmp.eq.s32.totalorder %s28, 3
      %p107 = por %p105, %p106
      %p109 = scmp.ne.s32.totalorder %s94, %s108
      %p110 = scmp.eq.s32.totalorder %s28, 0
      %p111 = por %p109, %p110
      %s113 = sadd.s32 %s112, 1
      %p116 = scmp.eq.s32.totalorder %s22, 3
      %p117 = scmp.ne.s32.totalorder %s112, %s114
      %p118 = scmp.eq.s32.totalorder %s22, 0
      %p119 = por %p117, %p118
      %p120 = scmp.ne.s32.totalorder %s112, %s114
      %p121 = scmp.eq.s32.totalorder %s27, 3
      %p122 = por %p120, %p121
      %p123 = scmp.ne.s32.totalorder %s114, %s115
      %p124 = scmp.eq.s32.totalorder %s27, 0
      %p125 = por %p123, %p124
      %p126 = scmp.ne.s32.totalorder %s114, %s115
      %p127 = scmp.eq.s32.totalorder %s28, 3
      %p128 = por %p126, %p127
      %p130 = scmp.ne.s32.totalorder %s115, %s129
      %p131 = scmp.eq.s32.totalorder %s28, 0
      %p132 = por %p130, %p131
      %s134 = sadd.s32 %s133, 1
      %p137 = scmp.eq.s32.totalorder %s22, 3
      %p138 = scmp.ne.s32.totalorder %s133, %s135
      %p139 = scmp.eq.s32.totalorder %s22, 0
      %p140 = por %p138, %p139
      %p141 = scmp.ne.s32.totalorder %s133, %s135
      %p142 = scmp.eq.s32.totalorder %s27, 3
      %p143 = por %p141, %p142
      %p144 = scmp.ne.s32.totalorder %s135, %s136
      %p145 = scmp.eq.s32.totalorder %s27, 0
      %p146 = por %p144, %p145
      %p147 = scmp.ne.s32.totalorder %s135, %s136
      %p148 = scmp.eq.s32.totalorder %s28, 3
      %p149 = por %p147, %p148
      %p151 = scmp.ne.s32.totalorder %s136, %s150
      %p152 = scmp.eq.s32.totalorder %s28, 0
      %p153 = por %p151, %p152
      %s155 = sadd.s32 %s154, 1
      %p158 = scmp.eq.s32.totalorder %s22, 3
      %p159 = scmp.ne.s32.totalorder %s154, %s156
      %p160 = scmp.eq.s32.totalorder %s22, 0
      %p161 = por %p159, %p160
      %p162 = scmp.ne.s32.totalorder %s154, %s156
      %p163 = scmp.eq.s32.totalorder %s27, 3
      %p164 = por %p162, %p163
      %p165 = scmp.ne.s32.totalorder %s156, %s157
      %p166 = scmp.eq.s32.totalorder %s27, 0
      %p167 = por %p165, %p166
      %p168 = scmp.ne.s32.totalorder %s156, %s157
      %p169 = scmp.eq.s32.totalorder %s28, 3
      %p170 = por %p168, %p169
      %p172 = scmp.ne.s32.totalorder %s157, %s171
      %p173 = scmp.eq.s32.totalorder %s28, 0
      %p174 = por %p172, %p173
      %s176 = sadd.s32 %s175, 1
      %p179 = scmp.eq.s32.totalorder %s22, 3
      %p180 = scmp.ne.s32.totalorder %s175, %s177
      %p181 = scmp.eq.s32.totalorder %s22, 0
      %p182 = por %p180, %p181
      %p183 = scmp.ne.s32.totalorder %s175, %s177
      %p184 = scmp.eq.s32.totalorder %s27, 3
      %p185 = por %p183, %p184
      %p186 = scmp.ne.s32.totalorder %s177, %s178
      %p187 = scmp.eq.s32.totalorder %s27, 0
      %p188 = por %p186, %p187
      %p189 = scmp.ne.s32.totalorder %s177, %s178
      %p190 = scmp.eq.s32.totalorder %s28, 3
      %p191 = por %p189, %p190
      %p193 = scmp.ne.s32.totalorder %s178, %s192
      %p194 = scmp.eq.s32.totalorder %s28, 0
      %p195 = por %p193, %p194
      %s196 = ssub.s32 %s29, %s41
      %s197 = ssub.s32 %s30, %s37
      %s198 = sor.u32 %s196, %s197
      %p199 = scmp.eq.s32.totalorder %s198, 0
      %s201 = sadd.s32 %s200, 1
      %s202 = scalar_select %p199, %s200, %s201
      %p205 = pneg %p199
      %p206 = scmp.eq.s32.totalorder %s22, 3
      %p207 = por %p205, %p206
      %p208 = scmp.ne.s32.totalorder %s200, %s203
      %p209 = scmp.eq.s32.totalorder %s22, 0
      %p210 = por %p208, %p209
      %p211 = scmp.ne.s32.totalorder %s200, %s203
      %p212 = scmp.eq.s32.totalorder %s27, 3
      %p213 = por %p211, %p212
      %p214 = scmp.ne.s32.totalorder %s203, %s204
      %p215 = scmp.eq.s32.totalorder %s27, 0
      %p216 = por %p214, %p215
      %p217 = scmp.ne.s32.totalorder %s203, %s204
      %p218 = scmp.eq.s32.totalorder %s28, 3
      %p219 = por %p217, %p218
      %p221 = scmp.ne.s32.totalorder %s204, %s220
      %p222 = scmp.eq.s32.totalorder %s28, 0
      %p223 = por %p221, %p222
      %s224 = ssub.s32 %s29, %s41
      %p225 = scmp.eq.s32.totalorder %s224, 0
      %s227 = sadd.s32 %s226, 1
      %s228 = scalar_select %p225, %s226, %s227
      %p231 = pneg %p225
      %p232 = scmp.eq.s32.totalorder %s22, 3
      %p233 = por %p231, %p232
      %p234 = scmp.ne.s32.totalorder %s226, %s229
      %p235 = scmp.eq.s32.totalorder %s22, 0
      %p236 = por %p234, %p235
      %p237 = scmp.ne.s32.totalorder %s226, %s229
      %p238 = scmp.eq.s32.totalorder %s27, 3
      %p239 = por %p237, %p238
      %p240 = scmp.ne.s32.totalorder %s229, %s230
      %p241 = scmp.eq.s32.totalorder %s27, 0
      %p242 = por %p240, %p241
      %p243 = scmp.ne.s32.totalorder %s229, %s230
      %p244 = scmp.eq.s32.totalorder %s28, 3
      %p245 = por %p243, %p244
      %p247 = scmp.ne.s32.totalorder %s230, %s246
      %p248 = scmp.eq.s32.totalorder %s28, 0
      %p249 = por %p247, %p248
      %s250 = ssub.s32 %s29, %s41
      %p251 = scmp.eq.s32.totalorder %s250, 0
      %s253 = sadd.s32 %s252, 1
      %s254 = scalar_select %p251, %s252, %s253
      %p257 = pneg %p251
      %p258 = scmp.eq.s32.totalorder %s22, 3
      %p259 = por %p257, %p258
      %p260 = scmp.ne.s32.totalorder %s252, %s255
      %p261 = scmp.eq.s32.totalorder %s22, 0
      %p262 = por %p260, %p261
      %p263 = scmp.ne.s32.totalorder %s252, %s255
      %p264 = scmp.eq.s32.totalorder %s27, 3
      %p265 = por %p263, %p264
      %p266 = scmp.ne.s32.totalorder %s255, %s256
      %p267 = scmp.eq.s32.totalorder %s27, 0
      %p268 = por %p266, %p267
      %p269 = scmp.ne.s32.totalorder %s255, %s256
      %p270 = scmp.eq.s32.totalorder %s28, 3
      %p271 = por %p269, %p270
      %p273 = scmp.ne.s32.totalorder %s256, %s272
      %p274 = scmp.eq.s32.totalorder %s28, 0
      %p275 = por %p273, %p274
      %p276 = scmp.le.s32.totalorder 1, %s22
      %p277 = scmp.lt.s32.totalorder %s22, 5
      %p278 = pnand %p276, %p277
      %p279 = pneg %p278
      // Predicated region
      $region9: #{_lambda_.1} parent=5 // pred_check
        _
      $region10: #{_lambda_.1} parent=5 // pred_check_branch
        %281 = sbr.rel (%p278) target = $region12
      $region11: #{_lambda_.1} parent=5 // pred_region
        %s282 = ssub.s32 %s22, 1
        // Predicated region
        $region13: #{_lambda_.1} parent=11 // pred_check
          %p283 = pneg %p83
        $region14: #{_lambda_.1} parent=11 // pred_check_branch
          %285 = sbr.rel (%p283) target = $region16
        $region15: #{_lambda_.1} parent=11 // pred_region
          _
        $region16: #{_lambda_.1} parent=11 // pred_fallthru
          _
        // Predicated region
        $region17: #{_lambda_.1} parent=11 // pred_check
          %p286 = pneg %p104
        $region18: #{_lambda_.1} parent=11 // pred_check_branch
          %288 = sbr.rel (%p286) target = $region20
        $region19: #{_lambda_.1} parent=11 // pred_region
          _
        $region20: #{_lambda_.1} parent=11 // pred_fallthru
          _
        // Predicated region
        $region21: #{_lambda_.1} parent=11 // pred_check
          %p289 = pneg %p125
        $region22: #{_lambda_.1} parent=11 // pred_check_branch
          %291 = sbr.rel (%p289) target = $region24
        $region23: #{_lambda_.1} parent=11 // pred_region
          _
        $region24: #{_lambda_.1} parent=11 // pred_fallthru
          _
        // Predicated region
        $region25: #{_lambda_.1} parent=11 // pred_check
          %p292 = pneg %p146
        $region26: #{_lambda_.1} parent=11 // pred_check_branch
          %294 = sbr.rel (%p292) target = $region28
        $region27: #{_lambda_.1} parent=11 // pred_region
          _
        $region28: #{_lambda_.1} parent=11 // pred_fallthru
          _
        // Predicated region
        $region29: #{_lambda_.1} parent=11 // pred_check
          %p295 = pneg %p167
        $region30: #{_lambda_.1} parent=11 // pred_check_branch
          %297 = sbr.rel (%p295) target = $region32
        $region31: #{_lambda_.1} parent=11 // pred_region
          _
        $region32: #{_lambda_.1} parent=11 // pred_fallthru
          _
        // Predicated region
        $region33: #{_lambda_.1} parent=11 // pred_check
          %p298 = pneg %p188
        $region34: #{_lambda_.1} parent=11 // pred_check_branch
          %300 = sbr.rel (%p298) target = $region36
        $region35: #{_lambda_.1} parent=11 // pred_region
          _
        $region36: #{_lambda_.1} parent=11 // pred_fallthru
          _
      $region12: #{_lambda_.1} parent=5 // pred_fallthru
        _
      %p301 = scmp.lt.s32.totalorder %s22, 4
      // Predicated region
      $region37: #{_lambda_.1} parent=5 // pred_check
        %p302 = pneg %p301
      $region38: #{_lambda_.1} parent=5 // pred_check_branch
        %304 = sbr.rel (%p302) target = $region40
      $region39: #{_lambda_.1} parent=5 // pred_region
        // Predicated region
        $region41: #{_lambda_.1} parent=39 // pred_check
          %p305 = pneg %p56
        $region42: #{_lambda_.1} parent=39 // pred_check_branch
          %307 = sbr.rel (%p305) target = $region44
        $region43: #{_lambda_.1} parent=39 // pred_region
          %s308 = smul.u32 16, %s30
          %p309 = scmp.lt.s32.totalorder %s29, 1
          %s310 = scalar_select %p309, %s29, 1
          %p311 = scmp.lt.s32.totalorder %s308, 31
          %s312 = scalar_select %p311, %s308, 31
          %s313 = smul.addr %s310, 32
          %s314 = sadd.s32 %s312, %s313
          %s315 = smul.addr %s314, 4
          %s316 = scalar_lea.vmem %s0, %s315
          %s317 = smul.u32 16, %s30
        $region44: #{_lambda_.1} parent=39 // pred_fallthru
          _
      $region40: #{_lambda_.1} parent=5 // pred_fallthru
        _
      %p318 = scmp.le.s32.totalorder 1, %s22
      %p319 = scmp.lt.s32.totalorder %s22, 5
      %p320 = pnand %p318, %p319
      %p321 = pneg %p320
      // Predicated region
      $region45: #{_lambda_.1} parent=5 // pred_check
        _
      $region46: #{_lambda_.1} parent=5 // pred_check_branch
        %323 = sbr.rel (%p320) target = $region48
      $region47: #{_lambda_.1} parent=5 // pred_region
        %s324 = ssub.s32 %s22, 1
        %s325 = smul.u32 16, %s32
        %p326 = scmp.lt.s32.totalorder %s31, 1
        %s327 = scalar_select %p326, %s31, 1
        %p328 = scmp.lt.s32.totalorder %s325, 31
        %s329 = scalar_select %p328, %s325, 31
        %s330 = smul.addr %s327, 32
        %s331 = sadd.s32 %s329, %s330
        %s332 = smul.addr %s331, 4
        %s333 = scalar_lea.vmem %s0, %s332
        %p334 = pneg %p62
        %p335 = pneg %p59
        %p336 = pneg %p83
        %p337 = pneg %p80
        %p338 = pneg %p104
        %p339 = pneg %p101
        %p340 = pneg %p125
        %p341 = pneg %p122
        %p342 = pneg %p146
        %p343 = pneg %p143
        %p344 = pneg %p167
        %p345 = pneg %p164
        %p346 = pneg %p188
        %p347 = pneg %p185
        %p348 = pneg %p216
        %p349 = pneg %p213
        %s350 = sand.u32 %s203, 1
        %s351 = sand.u32 %s203, 1
        %s352 = smul.addr %s351, 128
        %s353 = scalar_lea.vmem [#allocation3], %s352
        %p354 = pneg %p242
        %p355 = pneg %p239
        %s356 = sand.u32 %s229, 1
        %s357 = scalar_lea.sflag [#allocation5], %s356
        %s358 = sand.u32 %s229, 1
        %s359 = scalar_lea.vmem [#allocation4], %s358
        %p360 = pneg %p268
        %p361 = pneg %p265
        %s362 = sand.u32 %s255, 1
        %s363 = scalar_lea.sflag [#allocation7], %s362
        %s364 = sand.u32 %s255, 1
        %s365 = scalar_lea.vmem [#allocation6], %s364
        %s366 = smul.u32 16, %s32
        %p367 = scmp.lt.s32.totalorder %s31, 1
        %s368 = scalar_select %p367, %s31, 1
        %p369 = scmp.lt.s32.totalorder %s366, 31
        %s370 = scalar_select %p369, %s366, 31
        %s371 = smul.addr %s368, 32
        %s372 = sadd.s32 %s370, %s371
        %s373 = smul.addr %s372, 4
        %s374 = scalar_lea.vmem %s0, %s373
        %s375 = smul.u32 16, %s32
        %v377 = vld [vmem:[%s374] sm:$0xf]
        %v378 = vld [vmem:[%s374 + $0x4] sm:$0xf]
        %v379 = vld [vmem:[%s374 + $0x8] sm:$0xf]
        %v380 = vld [vmem:[%s374 + $0xc] sm:$0xf]
        %v381 = vld [vmem:[%s374 + $0x10] sm:$0xf]
        %v382 = vld [vmem:[%s374 + $0x14] sm:$0xf]
        %v383 = vld [vmem:[%s374 + $0x18] sm:$0xf]
        %v384 = vld [vmem:[%s374 + $0x1c] sm:$0xf]
        %v385 = vld [vmem:[%s374 + $0x20] sm:$0xf]
        %v386 = vld [vmem:[%s374 + $0x24] sm:$0xf]
        %v387 = vld [vmem:[%s374 + $0x28] sm:$0xf]
        %v388 = vld [vmem:[%s374 + $0x2c] sm:$0xf]
        %v389 = vld [vmem:[%s374 + $0x30] sm:$0xf]
        %v390 = vld [vmem:[%s374 + $0x34] sm:$0xf]
        %v391 = vld [vmem:[%s374 + $0x38] sm:$0xf]
        %v392 = vld [vmem:[%s374 + $0x3c] sm:$0xf]
        %v393 = vld [vmem:[%s1] sm:$0xf]
        %v394 = vld [vmem:[%s1 + $0x4] sm:$0xf]
        %v395 = vld [vmem:[%s1 + $0x8] sm:$0xf]
        %v396 = vld [vmem:[%s1 + $0xc] sm:$0xf]
        %v397 = vld [vmem:[%s2] sm:$0x1]
        %v399 = vlaneseq
        %v400 = vshrl.u32 %v399, 7
        %v401 = vsub.s32 0, %v400
        %v402 = vrot.slane %v397, %v401
        %v420 = vunpack.c.l.b16 %v377
        %v421 = vunpack.c.l.b16 %v378
        %v422 = vunpack.c.l.b16 %v379
        %v423 = vunpack.c.l.b16 %v380
        %v424 = vunpack.c.l.b16 %v381
        %v425 = vunpack.c.l.b16 %v382
        %v426 = vunpack.c.l.b16 %v383
        %v427 = vunpack.c.l.b16 %v384
        %v428 = vunpack.c.l.b16 %v385
        %v429 = vunpack.c.l.b16 %v386
        %v430 = vunpack.c.l.b16 %v387
        %v431 = vunpack.c.l.b16 %v388
        %v432 = vunpack.c.l.b16 %v389
        %v433 = vunpack.c.l.b16 %v390
        %v434 = vunpack.c.l.b16 %v391
        %v435 = vunpack.c.l.b16 %v392
        %v436 = vpack.c.b16 %v421, %v420
        %v437 = vpack.c.b16 %v423, %v422
        %v438 = vpack.c.b16 %v425, %v424
        %v439 = vpack.c.b16 %v427, %v426
        %v440 = vpack.c.b16 %v429, %v428
        %v441 = vpack.c.b16 %v431, %v430
        %v442 = vpack.c.b16 %v433, %v432
        %v443 = vpack.c.b16 %v435, %v434
        %v448 = vunpack.c.l.b16 %v393
        %v449 = vunpack.c.l.b16 %v394
        %v450 = vunpack.c.l.b16 %v395
        %v451 = vunpack.c.l.b16 %v396
        %v452 = vpack.c.b16 %v449, %v448
        %v453 = vpack.c.b16 %v451, %v450
        %vm456 = vcmask 261120
        %v458 = vsel %vm456, %v436, 0
        %v461 = vsel %vm456, %v437, 0
        %v464 = vsel %vm456, %v438, 0
        %v467 = vsel %vm456, %v439, 0
        %v470 = vsel %vm456, %v440, 0
        %v473 = vsel %vm456, %v441, 0
        %v476 = vsel %vm456, %v442, 0
        %v479 = vsel %vm456, %v443, 0
        %481 = vmatprep.subr.bf16.mxu0 0
        %482 = vmatpush1.bf16.msra.mxu0 %v452
        %483 = vmatprep.subr.bf16.mxu0 0
        %484 = vmatpush1.bf16.msra.mxu0 %v453
        %485 = vmatprep.subr.bf16.mxu0 0
        %486 = vmatpush1.bf16.msra.mxu0 0
        %487 = vmatprep.subr.bf16.mxu0 0
        %488 = vmatpush1.bf16.msra.mxu0 0
        %489 = vmatprep.subr.bf16.mxu0 0
        %490 = vmatpush1.bf16.msra.mxu0 0
        %491 = vmatprep.subr.bf16.mxu0 0
        %492 = vmatpush1.bf16.msra.mxu0 0
        %493 = vmatprep.subr.bf16.mxu0 0
        %494 = vmatpush1.bf16.msra.mxu0 0
        %495 = vmatprep.subr.bf16.mxu0 0
        %496 = vmatpush1.bf16.msra.mxu0 0
        %497 = vmatprep.subr.bf16.mxu0 0
        %498 = vmatpush1.bf16.msra.mxu0 0
        %499 = vmatprep.subr.bf16.mxu0 0
        %500 = vmatpush1.bf16.msra.mxu0 0
        %501 = vmatprep.subr.bf16.mxu0 0
        %502 = vmatpush1.bf16.msra.mxu0 0
        %503 = vmatprep.subr.bf16.mxu0 0
        %504 = vmatpush1.bf16.msra.mxu0 0
        %505 = vmatprep.subr.bf16.mxu0 0
        %506 = vmatpush1.bf16.msra.mxu0 0
        %507 = vmatprep.subr.bf16.mxu0 0
        %508 = vmatpush1.bf16.msra.mxu0 0
        %509 = vmatprep.subr.bf16.mxu0 0
        %510 = vmatpush1.bf16.msra.mxu0 0
        %511 = vmatprep.subr.bf16.mxu0 0
        %512 = vmatpush1.bf16.msra.mxu0 0
        %513 = vmatprep.mubr.bf16.mxu0 0
        %514 = vmatmul.mubr.bf16.gmra.mrb[0].mxu0 %v458
        %v515 = vpop.f32.mrb[0].mxu0
        %v516 = vadd.f32 %v402, %v515
        %v517 = vpop.f32.mrb[0].mxu0
        %v518 = vpop.f32.mrb[0].mxu0
        %v519 = vadd.f32 %v402, %v518
        %v520 = vpop.f32.mrb[0].mxu0
        %521 = vmatprep.mubr.bf16.mxu0 0
        %522 = vmatmul.mubr.bf16.gmra.mrb[0].mxu0 %v461
        %v523 = vpop.f32.mrb[0].mxu0
        %v524 = vadd.f32 %v402, %v523
        %v525 = vpop.f32.mrb[0].mxu0
        %v526 = vpop.f32.mrb[0].mxu0
        %v527 = vadd.f32 %v402, %v526
        %v528 = vpop.f32.mrb[0].mxu0
        %529 = vmatprep.mubr.bf16.mxu0 0
        %530 = vmatmul.mubr.bf16.gmra.mrb[0].mxu0 %v464
        %v531 = vpop.f32.mrb[0].mxu0
        %v532 = vadd.f32 %v402, %v531
        %v533 = vpop.f32.mrb[0].mxu0
        %v534 = vpop.f32.mrb[0].mxu0
        %v535 = vadd.f32 %v402, %v534
        %v536 = vpop.f32.mrb[0].mxu0
        %537 = vmatprep.mubr.bf16.mxu0 0
        %538 = vmatmul.mubr.bf16.gmra.mrb[0].mxu0 %v467
        %v539 = vpop.f32.mrb[0].mxu0
        %v540 = vadd.f32 %v402, %v539
        %v541 = vpop.f32.mrb[0].mxu0
        %v542 = vpop.f32.mrb[0].mxu0
        %v543 = vadd.f32 %v402, %v542
        %v544 = vpop.f32.mrb[0].mxu0
        %545 = vmatprep.mubr.bf16.mxu0 0
        %546 = vmatmul.mubr.bf16.gmra.mrb[0].mxu0 %v470
        %v547 = vpop.f32.mrb[0].mxu0
        %v548 = vadd.f32 %v402, %v547
        %v549 = vpop.f32.mrb[0].mxu0
        %v550 = vpop.f32.mrb[0].mxu0
        %v551 = vadd.f32 %v402, %v550
        %v552 = vpop.f32.mrb[0].mxu0
        %553 = vmatprep.mubr.bf16.mxu0 0
        %554 = vmatmul.mubr.bf16.gmra.mrb[0].mxu0 %v473
        %v555 = vpop.f32.mrb[0].mxu0
        %v556 = vadd.f32 %v402, %v555
        %v557 = vpop.f32.mrb[0].mxu0
        %v558 = vpop.f32.mrb[0].mxu0
        %v559 = vadd.f32 %v402, %v558
        %v560 = vpop.f32.mrb[0].mxu0
        %561 = vmatprep.mubr.bf16.mxu0 0
        %562 = vmatmul.mubr.bf16.gmra.mrb[0].mxu0 %v476
        %v563 = vpop.f32.mrb[0].mxu0
        %v564 = vadd.f32 %v402, %v563
        %v565 = vpop.f32.mrb[0].mxu0
        %v566 = vpop.f32.mrb[0].mxu0
        %v567 = vadd.f32 %v402, %v566
        %v568 = vpop.f32.mrb[0].mxu0
        %569 = vmatprep.mubr.bf16.mxu0 0
        %570 = vmatmul.mubr.bf16.gmra.mrb[0].mxu0 %v479
        %v571 = vpop.f32.mrb[0].mxu0
        %v572 = vadd.f32 %v402, %v571
        %v573 = vpop.f32.mrb[0].mxu0
        %v574 = vpop.f32.mrb[0].mxu0
        %v575 = vadd.f32 %v402, %v574
        %v576 = vpop.f32.mrb[0].mxu0
        %577 = vdwg.mxu0
        %v578 = vxor.u32 %v516, 2147483648
        %v579 = vxor.u32 %v519, 2147483648
        %v580 = vxor.u32 %v524, 2147483648
        %v581 = vxor.u32 %v527, 2147483648
        %v582 = vxor.u32 %v532, 2147483648
        %v583 = vxor.u32 %v535, 2147483648
        %v584 = vxor.u32 %v540, 2147483648
        %v585 = vxor.u32 %v543, 2147483648
        %v586 = vxor.u32 %v548, 2147483648
        %v587 = vxor.u32 %v551, 2147483648
        %v588 = vxor.u32 %v556, 2147483648
        %v589 = vxor.u32 %v559, 2147483648
        %v590 = vxor.u32 %v564, 2147483648
        %v591 = vxor.u32 %v567, 2147483648
        %v592 = vxor.u32 %v572, 2147483648
        %v593 = vxor.u32 %v575, 2147483648
        %v594 = vmul.f32 %v578, 1.442695
        %v595 = vpow.pop %v594
        %v596 = vmul.f32 %v579, 1.442695
        %v597 = vpow.pop %v596
        %v598 = vmul.f32 %v580, 1.442695
        %v599 = vpow.pop %v598
        %v600 = vmul.f32 %v581, 1.442695
        %v601 = vpow.pop %v600
        %v602 = vmul.f32 %v582, 1.442695
        %v603 = vpow.pop %v602
        %v604 = vmul.f32 %v583, 1.442695
        %v605 = vpow.pop %v604
        %v606 = vmul.f32 %v584, 1.442695
        %v607 = vpow.pop %v606
        %v608 = vmul.f32 %v585, 1.442695
        %v609 = vpow.pop %v608
        %v610 = vmul.f32 %v586, 1.442695
        %v611 = vpow.pop %v610
        %v612 = vmul.f32 %v587, 1.442695
        %v613 = vpow.pop %v612
        %v614 = vmul.f32 %v588, 1.442695
        %v615 = vpow.pop %v614
        %v616 = vmul.f32 %v589, 1.442695
        %v617 = vpow.pop %v616
        %v618 = vmul.f32 %v590, 1.442695
        %v619 = vpow.pop %v618
        %v620 = vmul.f32 %v591, 1.442695
        %v621 = vpow.pop %v620
        %v622 = vmul.f32 %v592, 1.442695
        %v623 = vpow.pop %v622
        %v624 = vmul.f32 %v593, 1.442695
        %v625 = vpow.pop %v624
        %v626 = vadd.f32 %v595, 1.0
        %v627 = vadd.f32 %v597, 1.0
        %v628 = vadd.f32 %v599, 1.0
        %v629 = vadd.f32 %v601, 1.0
        %v630 = vadd.f32 %v603, 1.0
        %v631 = vadd.f32 %v605, 1.0
        %v632 = vadd.f32 %v607, 1.0
        %v633 = vadd.f32 %v609, 1.0
        %v634 = vadd.f32 %v611, 1.0
        %v635 = vadd.f32 %v613, 1.0
        %v636 = vadd.f32 %v615, 1.0
        %v637 = vadd.f32 %v617, 1.0
        %v638 = vadd.f32 %v619, 1.0
        %v639 = vadd.f32 %v621, 1.0
        %v640 = vadd.f32 %v623, 1.0
        %v641 = vadd.f32 %v625, 1.0
        %v642 = vrcp.pop %v626
        %v643 = vmul.f32 1.0, %v642
        %v644 = vrcp.pop %v627
        %v645 = vmul.f32 1.0, %v644
        %v646 = vrcp.pop %v628
        %v647 = vmul.f32 1.0, %v646
        %v648 = vrcp.pop %v629
        %v649 = vmul.f32 1.0, %v648
        %v650 = vrcp.pop %v630
        %v651 = vmul.f32 1.0, %v650
        %v652 = vrcp.pop %v631
        %v653 = vmul.f32 1.0, %v652
        %v654 = vrcp.pop %v632
        %v655 = vmul.f32 1.0, %v654
        %v656 = vrcp.pop %v633
        %v657 = vmul.f32 1.0, %v656
        %v658 = vrcp.pop %v634
        %v659 = vmul.f32 1.0, %v658
        %v660 = vrcp.pop %v635
        %v661 = vmul.f32 1.0, %v660
        %v662 = vrcp.pop %v636
        %v663 = vmul.f32 1.0, %v662
        %v664 = vrcp.pop %v637
        %v665 = vmul.f32 1.0, %v664
        %v666 = vrcp.pop %v638
        %v667 = vmul.f32 1.0, %v666
        %v668 = vrcp.pop %v639
        %v669 = vmul.f32 1.0, %v668
        %v670 = vrcp.pop %v640
        %v671 = vmul.f32 1.0, %v670
        %v672 = vrcp.pop %v641
        %v673 = vmul.f32 1.0, %v672
        %v674 = vmul.f32 %v516, %v643
        %v675 = vmul.f32 %v519, %v645
        %v676 = vmul.f32 %v524, %v647
        %v677 = vmul.f32 %v527, %v649
        %v678 = vmul.f32 %v532, %v651
        %v679 = vmul.f32 %v535, %v653
        %v680 = vmul.f32 %v540, %v655
        %v681 = vmul.f32 %v543, %v657
        %v682 = vmul.f32 %v548, %v659
        %v683 = vmul.f32 %v551, %v661
        %v684 = vmul.f32 %v556, %v663
        %v685 = vmul.f32 %v559, %v665
        %v686 = vmul.f32 %v564, %v667
        %v687 = vmul.f32 %v567, %v669
        %v688 = vmul.f32 %v572, %v671
        %v689 = vmul.f32 %v575, %v673
        %690 = vxpose.xlu0.b32.start [1/16] %v674, 128
        %691 = vxpose.xlu0.b32.cont [2/16] %v675, 128
        %692 = vxpose.xlu0.b32.cont [3/16] %v676, 128
        %693 = vxpose.xlu0.b32.cont [4/16] %v677, 128
        %694 = vxpose.xlu0.b32.cont [5/16] %v678, 128
        %695 = vxpose.xlu0.b32.cont [6/16] %v679, 128
        %696 = vxpose.xlu0.b32.cont [7/16] %v680, 128
        %697 = vxpose.xlu0.b32.cont [8/16] %v681, 128
        %698 = vxpose.xlu0.b32.cont [9/16] %v682, 128
        %699 = vxpose.xlu0.b32.cont [10/16] %v683, 128
        %700 = vxpose.xlu0.b32.cont [11/16] %v684, 128
        %701 = vxpose.xlu0.b32.cont [12/16] %v685, 128
        %702 = vxpose.xlu0.b32.cont [13/16] %v686, 128
        %703 = vxpose.xlu0.b32.cont [14/16] %v687, 128
        %704 = vxpose.xlu0.b32.cont [15/16] %v688, 128
        %705 = vxpose.xlu0.b32.end [16/16] %v689, 128
        %v706 = vpop.trf.xlu0
        %v707 = vpop.trf.xlu0
        %v708 = vpop.trf.xlu0
        %v709 = vpop.trf.xlu0
        %v710 = vpop.trf.xlu0
        %v711 = vpop.trf.xlu0
        %v712 = vpop.trf.xlu0
        %v713 = vpop.trf.xlu0
        %v714 = vpop.trf.xlu0
        %v715 = vpop.trf.xlu0
        %v716 = vpop.trf.xlu0
        %v717 = vpop.trf.xlu0
        %v718 = vpop.trf.xlu0
        %v719 = vpop.trf.xlu0
        %v720 = vpop.trf.xlu0
        %v721 = vpop.trf.xlu0
        %722 = vst [vmem:[%s353] sm:$0xff] %v706
        %723 = vst [vmem:[%s353 + $0x8] sm:$0xff] %v707
        %724 = vst [vmem:[%s353 + $0x10] sm:$0xff] %v708
        %725 = vst [vmem:[%s353 + $0x18] sm:$0xff] %v709
        %726 = vst [vmem:[%s353 + $0x20] sm:$0xff] %v710
        %727 = vst [vmem:[%s353 + $0x28] sm:$0xff] %v711
        %728 = vst [vmem:[%s353 + $0x30] sm:$0xff] %v712
        %729 = vst [vmem:[%s353 + $0x38] sm:$0xff] %v713
        %730 = vst [vmem:[%s353 + $0x40] sm:$0xff] %v714
        %731 = vst [vmem:[%s353 + $0x48] sm:$0xff] %v715
        %732 = vst [vmem:[%s353 + $0x50] sm:$0xff] %v716
        %733 = vst [vmem:[%s353 + $0x58] sm:$0xff] %v717
        %734 = vst [vmem:[%s353 + $0x60] sm:$0xff] %v718
        %735 = vst [vmem:[%s353 + $0x68] sm:$0xff] %v719
        %736 = vst [vmem:[%s353 + $0x70] sm:$0xff] %v720
        %737 = vst [vmem:[%s353 + $0x78] sm:$0xff] %v721
        %p738 = scmp.eq.s32.totalorder %s32, 0
        // Predicated region
        $region49: #{_lambda_.1} parent=47 // pred_check
          %p739 = pneg %p738
        $region50: #{_lambda_.1} parent=47 // pred_check_branch
          %741 = sbr.rel (%p739) target = $region52
        $region51: #{_lambda_.1} parent=47 // pred_region
          %742 = vst [vmem:[#allocation2] sm:$0x1] 0.0
        $region52: #{_lambda_.1} parent=47 // pred_fallthru
          _
        %v743 = vld [vmem:[#allocation2] sm:$0x1]
        %v744 = vadd.f32 %v674, %v675
        %v745 = vadd.f32 %v744, %v676
        %v746 = vadd.f32 %v745, %v677
        %v747 = vadd.f32 %v746, %v678
        %v748 = vadd.f32 %v747, %v679
        %v749 = vadd.f32 %v748, %v680
        %v750 = vadd.f32 %v749, %v681
        %v751 = vadd.f32 %v750, %v682
        %v752 = vadd.f32 %v751, %v683
        %v753 = vadd.f32 %v752, %v684
        %v754 = vadd.f32 %v753, %v685
        %v755 = vadd.f32 %v754, %v686
        %v756 = vadd.f32 %v755, %v687
        %v757 = vadd.f32 %v756, %v688
        %v758 = vadd.f32 %v757, %v689
        %v759 = vrot.slane %v758, 4
        %v760 = vadd.f32 %v758, %v759
        %v761 = vrot.slane %v760, 2
        %v762 = vadd.f32 %v760, %v761
        %v763 = vrot.slane %v762, 1
        %v764 = vadd.f32 %v762, %v763
        %v765 = vadd.f32 %v743, %v764
        %766 = vst [vmem:[#allocation2] sm:$0x1] %v765
        %p767 = scmp.eq.s32.totalorder %s32, 1
        // Predicated region
        $region53: #{_lambda_.1} parent=47 // pred_check
          %p768 = pneg %p767
        $region54: #{_lambda_.1} parent=47 // pred_check_branch
          %770 = sbr.rel (%p768) target = $region56
        $region55: #{_lambda_.1} parent=47 // pred_region
          %v771 = vld [vmem:[#allocation2] sm:$0x1]
          %v772 = vmul.f32 %v771, 0.00390625
          %773 = vst [vmem:[%s359] sm:$0x1] %v772
          %v774 = vld [vmem:[%s3] sm:$0x1]
          %v775 = vmul.f32 %v772, %v774
          %v776 = vld [vmem:[%s4] sm:$0x1]
          %v777 = vadd.f32 %v775, %v776
          %v778 = vld [vmem:[%s5] sm:$0xff]
          %v779 = vld [vmem:[%s5 + $0x8] sm:$0xff]
          %v780 = vld [vmem:[%s5 + $0x10] sm:$0xff]
          %v781 = vld [vmem:[%s5 + $0x18] sm:$0xff]
          %v782 = vld [vmem:[%s5 + $0x20] sm:$0xff]
          %v783 = vld [vmem:[%s5 + $0x28] sm:$0xff]
          %v784 = vld [vmem:[%s5 + $0x30] sm:$0xff]
          %v785 = vld [vmem:[%s5 + $0x38] sm:$0xff]
          %v786 = vld [vmem:[%s5 + $0x40] sm:$0xff]
          %v787 = vld [vmem:[%s5 + $0x48] sm:$0xff]
          %v788 = vld [vmem:[%s5 + $0x50] sm:$0xff]
          %v789 = vld [vmem:[%s5 + $0x58] sm:$0xff]
          %v790 = vld [vmem:[%s5 + $0x60] sm:$0xff]
          %v791 = vld [vmem:[%s5 + $0x68] sm:$0xff]
          %v792 = vld [vmem:[%s5 + $0x70] sm:$0xff]
          %v793 = vld [vmem:[%s5 + $0x78] sm:$0xff]
          %v794 = vld [vmem:[%s6] sm:$0x1]
          %795 = vmatprep.subr.mxu0 0.0
          %796 = vmatpush1.msra.mxu0 %v778
          %797 = vmatprep.subr.mxu0 0.0
          %798 = vmatpush1.msra.mxu0 %v779
          %799 = vmatprep.subr.mxu0 0.0
          %800 = vmatpush1.msra.mxu0 %v780
          %801 = vmatprep.subr.mxu0 0.0
          %802 = vmatpush1.msra.mxu0 %v781
          %803 = vmatprep.subr.mxu0 0.0
          %804 = vmatpush1.msra.mxu0 %v782
          %805 = vmatprep.subr.mxu0 0.0
          %806 = vmatpush1.msra.mxu0 %v783
          %807 = vmatprep.subr.mxu0 0.0
          %808 = vmatpush1.msra.mxu0 %v784
          %809 = vmatprep.subr.mxu0 0.0
          %810 = vmatpush1.msra.mxu0 %v785
          %811 = vmatprep.subr.mxu0 0.0
          %812 = vmatpush1.msra.mxu0 %v786
          %813 = vmatprep.subr.mxu0 0.0
          %814 = vmatpush1.msra.mxu0 %v787
          %815 = vmatprep.subr.mxu0 0.0
          %816 = vmatpush1.msra.mxu0 %v788
          %817 = vmatprep.subr.mxu0 0.0
          %818 = vmatpush1.msra.mxu0 %v789
          %819 = vmatprep.subr.mxu0 0.0
          %820 = vmatpush1.msra.mxu0 %v790
          %821 = vmatprep.subr.mxu0 0.0
          %822 = vmatpush1.msra.mxu0 %v791
          %823 = vmatprep.subr.mxu0 0.0
          %824 = vmatpush1.msra.mxu0 %v792
          %825 = vmatprep.subr.mxu0 0.0
          %826 = vmatpush1.msra.mxu0 %v793
          %827 = vmatprep.subr.mxu0 0.0
          %828 = vmatpush1.msra.mxu0 0.0
          %829 = vmatprep.subr.mxu0 0.0
          %830 = vmatpush1.msra.mxu0 0.0
          %831 = vmatprep.subr.mxu0 0.0
          %832 = vmatpush1.msra.mxu0 0.0
          %833 = vmatprep.subr.mxu0 0.0
          %834 = vmatpush1.msra.mxu0 0.0
          %835 = vmatprep.subr.mxu0 0.0
          %836 = vmatpush1.msra.mxu0 0.0
          %837 = vmatprep.subr.mxu0 0.0
          %838 = vmatpush1.msra.mxu0 0.0
          %839 = vmatprep.subr.mxu0 0.0
          %840 = vmatpush1.msra.mxu0 0.0
          %841 = vmatprep.subr.mxu0 0.0
          %842 = vmatpush1.msra.mxu0 0.0
          %843 = vmatprep.subr.mxu0 0.0
          %844 = vmatpush1.msra.mxu0 0.0
          %845 = vmatprep.subr.mxu0 0.0
          %846 = vmatpush1.msra.mxu0 0.0
          %847 = vmatprep.subr.mxu0 0.0
          %848 = vmatpush1.msra.mxu0 0.0
          %849 = vmatprep.subr.mxu0 0.0
          %850 = vmatpush1.msra.mxu0 0.0
          %851 = vmatprep.subr.mxu0 0.0
          %852 = vmatpush1.msra.mxu0 0.0
          %853 = vmatprep.subr.mxu0 0.0
          %854 = vmatpush1.msra.mxu0 0.0
          %855 = vmatprep.subr.mxu0 0.0
          %856 = vmatpush1.msra.mxu0 0.0
          %857 = vmatprep.subr.mxu0 0.0
          %858 = vmatpush1.msra.mxu0 0.0
          %859 = vmatprep.mubr.f32.mxu0 0.0
          %860 = vmatmul.mubr.f32.gmra.mrb[0].mxu0 %v777
          %v861 = vpop.f32.mrb[0].mxu0
          %v862 = vadd.f32 %v794, %v861
          %v863 = vpop.f32.mrb[0].mxu0
          %864 = vdwg.mxu0
          %865 = vst [vmem:[%s365] sm:$0x1] %v862
        $region56: #{_lambda_.1} parent=47 // pred_fallthru
          _
        %s866 = sand.u32 %s203, 1
        %s867 = sand.u32 %s203, 1
        %s868 = smul.addr %s867, 128
        %s869 = scalar_lea.vmem [#allocation3], %s868
        %s870 = sand.u32 %s229, 1
        %s871 = scalar_lea.sflag [#allocation5], %s870
        %s872 = sand.u32 %s229, 1
        %s873 = scalar_lea.vmem [#allocation4], %s872
        %s874 = sand.u32 %s255, 1
        %s875 = scalar_lea.sflag [#allocation7], %s874
        %s876 = sand.u32 %s255, 1
        %s877 = scalar_lea.vmem [#allocation6], %s876
        // Predicated region
        $region57: #{_lambda_.1} parent=47 // pred_check
          %p878 = pneg %p213
        $region58: #{_lambda_.1} parent=47 // pred_check_branch
          %880 = sbr.rel (%p878) target = $region60
        $region59: #{_lambda_.1} parent=47 // pred_region
          %s881 = smul.addr %s31, 32
          %s882 = sadd.s32 %s32, %s881
          %s883 = smul.addr %s882, 8
          %s884 = scalar_lea.vmem %s7, %s883
          // Predicated region
          $region61: #{_lambda_.1} parent=59 // pred_check
            _
          $region62: #{_lambda_.1} parent=59 // pred_check_branch
            %886 = sbr.rel (0) target = $region64
          $region63: #{_lambda_.1} parent=59 // pred_region
            // Predicated region
            $region65: #{_lambda_.1} parent=63 // pred_check
              _
            $region66: #{_lambda_.1} parent=63 // pred_check_branch
              %888 = sbr.rel (0) target = $region68
            $region67: #{_lambda_.1} parent=63 // pred_region
              // Predicated region
              $region80: #{_lambda_.1} parent=67 // pred_check
                _
              $region81: #{_lambda_.1} parent=67 // pred_check_branch
                %933 = sbr.rel (0) target = $region83
              $region82: #{_lambda_.1} parent=67 // pred_region
                loop: start=0, step=1, limit=1
                $region84: #{_lambda_.1} parent=82 // loop_pre_header
                  _
                $region85: #{_lambda_.1} parent=82 // loop_header
                  %s935 = sphi 0, %s939
                  %p936 = scmp.ge.s32.totalorder %s935, 1
                  %s940 = sphi %s869, %s869
                  %s941 = sphi %s884, %s884
                $region86: #{_lambda_.1} parent=82 // loop_header_branch
                  %938 = sbr.rel (%p936) target = $region90
                $region87: #{_lambda_.1} parent=82 // loop_body
                  %v942 = vld [vmem:[%s940] sm:$0xff]
                  %943 = vst [vmem:[%s941] sm:$0xff] %v942
                  %v944 = vld [vmem:[%s940 + $0x8] sm:$0xff]
                  %945 = vst [vmem:[%s941 + $0x10] sm:$0xff] %v944
                  %v946 = vld [vmem:[%s940 + $0x10] sm:$0xff]
                  %947 = vst [vmem:[%s941 + $0x20] sm:$0xff] %v946
                  %v948 = vld [vmem:[%s940 + $0x18] sm:$0xff]
                  %949 = vst [vmem:[%s941 + $0x30] sm:$0xff] %v948
                  %v950 = vld [vmem:[%s940 + $0x20] sm:$0xff]
                  %951 = vst [vmem:[%s941 + $0x40] sm:$0xff] %v950
                  %v952 = vld [vmem:[%s940 + $0x28] sm:$0xff]
                  %953 = vst [vmem:[%s941 + $0x50] sm:$0xff] %v952
                  %v954 = vld [vmem:[%s940 + $0x30] sm:$0xff]
                  %955 = vst [vmem:[%s941 + $0x60] sm:$0xff] %v954
                  %v956 = vld [vmem:[%s940 + $0x38] sm:$0xff]
                  %957 = vst [vmem:[%s941 + $0x70] sm:$0xff] %v956
                  %v958 = vld [vmem:[%s940 + $0x40] sm:$0xff]
                  %959 = vst [vmem:[%s941 + $0x80] sm:$0xff] %v958
                  %v960 = vld [vmem:[%s940 + $0x48] sm:$0xff]
                  %961 = vst [vmem:[%s941 + $0x90] sm:$0xff] %v960
                  %v962 = vld [vmem:[%s940 + $0x50] sm:$0xff]
                  %963 = vst [vmem:[%s941 + $0xa0] sm:$0xff] %v962
                  %v964 = vld [vmem:[%s940 + $0x58] sm:$0xff]
                  %965 = vst [vmem:[%s941 + $0xb0] sm:$0xff] %v964
                  %v966 = vld [vmem:[%s940 + $0x60] sm:$0xff]
                  %967 = vst [vmem:[%s941 + $0xc0] sm:$0xff] %v966
                  %v968 = vld [vmem:[%s940 + $0x68] sm:$0xff]
                  %969 = vst [vmem:[%s941 + $0xd0] sm:$0xff] %v968
                  %v970 = vld [vmem:[%s940 + $0x70] sm:$0xff]
                  %971 = vst [vmem:[%s941 + $0xe0] sm:$0xff] %v970
                  %v972 = vld [vmem:[%s940 + $0x78] sm:$0xff]
                  %973 = vst [vmem:[%s941 + $0xf0] sm:$0xff] %v972
                $region88: #{_lambda_.1} parent=82 // loop_footer
                  %s939 = sadd.s32 1, %s935
                $region89: #{_lambda_.1} parent=82 // loop_footer_branch
                  %934 = sbr.rel target = $region85
                $region90: #{_lambda_.1} parent=82 // loop_exit
                  _
              $region83: #{_lambda_.1} parent=67 // pred_fallthru
                _
              // Predicated region
              $region91: #{_lambda_.1} parent=67 // pred_check
                _
              $region92: #{_lambda_.1} parent=67 // pred_check_branch
                %975 = sbr.rel target = $region94
              $region93: #{_lambda_.1} parent=67 // pred_region
                _
              $region94: #{_lambda_.1} parent=67 // pred_fallthru
                _
            $region68: #{_lambda_.1} parent=63 // pred_fallthru
              _
            // Predicated region
            $region69: #{_lambda_.1} parent=63 // pred_check
              _
            $region70: #{_lambda_.1} parent=63 // pred_check_branch
              %890 = sbr.rel target = $region72
            $region71: #{_lambda_.1} parent=63 // pred_region
              loop: start=0, step=1, limit=1
              $region73: #{_lambda_.1} parent=71 // loop_pre_header
                _
              $region74: #{_lambda_.1} parent=71 // loop_header
                %s893 = sphi 0, %s897
                %p894 = scmp.ge.s32.totalorder %s893, 1
                %s898 = sphi %s869, %s869
                %s899 = sphi %s884, %s884
              $region75: #{_lambda_.1} parent=71 // loop_header_branch
                %896 = sbr.rel (%p894) target = $region79
              $region76: #{_lambda_.1} parent=71 // loop_body
                %v900 = vld [vmem:[%s898] sm:$0xff]
                %901 = vst [vmem:[%s899] sm:$0xff] %v900
                %v902 = vld [vmem:[%s898 + $0x8] sm:$0xff]
                %903 = vst [vmem:[%s899 + $0x10] sm:$0xff] %v902
                %v904 = vld [vmem:[%s898 + $0x10] sm:$0xff]
                %905 = vst [vmem:[%s899 + $0x20] sm:$0xff] %v904
                %v906 = vld [vmem:[%s898 + $0x18] sm:$0xff]
                %907 = vst [vmem:[%s899 + $0x30] sm:$0xff] %v906
                %v908 = vld [vmem:[%s898 + $0x20] sm:$0xff]
                %909 = vst [vmem:[%s899 + $0x40] sm:$0xff] %v908
                %v910 = vld [vmem:[%s898 + $0x28] sm:$0xff]
                %911 = vst [vmem:[%s899 + $0x50] sm:$0xff] %v910
                %v912 = vld [vmem:[%s898 + $0x30] sm:$0xff]
                %913 = vst [vmem:[%s899 + $0x60] sm:$0xff] %v912
                %v914 = vld [vmem:[%s898 + $0x38] sm:$0xff]
                %915 = vst [vmem:[%s899 + $0x70] sm:$0xff] %v914
                %v916 = vld [vmem:[%s898 + $0x40] sm:$0xff]
                %917 = vst [vmem:[%s899 + $0x80] sm:$0xff] %v916
                %v918 = vld [vmem:[%s898 + $0x48] sm:$0xff]
                %919 = vst [vmem:[%s899 + $0x90] sm:$0xff] %v918
                %v920 = vld [vmem:[%s898 + $0x50] sm:$0xff]
                %921 = vst [vmem:[%s899 + $0xa0] sm:$0xff] %v920
                %v922 = vld [vmem:[%s898 + $0x58] sm:$0xff]
                %923 = vst [vmem:[%s899 + $0xb0] sm:$0xff] %v922
                %v924 = vld [vmem:[%s898 + $0x60] sm:$0xff]
                %925 = vst [vmem:[%s899 + $0xc0] sm:$0xff] %v924
                %v926 = vld [vmem:[%s898 + $0x68] sm:$0xff]
                %927 = vst [vmem:[%s899 + $0xd0] sm:$0xff] %v926
                %v928 = vld [vmem:[%s898 + $0x70] sm:$0xff]
                %929 = vst [vmem:[%s899 + $0xe0] sm:$0xff] %v928
                %v930 = vld [vmem:[%s898 + $0x78] sm:$0xff]
                %931 = vst [vmem:[%s899 + $0xf0] sm:$0xff] %v930
              $region77: #{_lambda_.1} parent=71 // loop_footer
                %s897 = sadd.s32 1, %s893
              $region78: #{_lambda_.1} parent=71 // loop_footer_branch
                %892 = sbr.rel target = $region74
              $region79: #{_lambda_.1} parent=71 // loop_exit
                _
            $region72: #{_lambda_.1} parent=63 // pred_fallthru
              _
          $region64: #{_lambda_.1} parent=59 // pred_fallthru
            _
          %976 = vnop
        $region60: #{_lambda_.1} parent=47 // pred_fallthru
          _
        // Predicated region
        $region95: #{_lambda_.1} parent=47 // pred_check
          %p977 = pneg %p239
        $region96: #{_lambda_.1} parent=47 // pred_check_branch
          %979 = sbr.rel (%p977) target = $region98
        $region97: #{_lambda_.1} parent=47 // pred_region
          %s981 = ssub.s32 16, 16
          %982 = vsyncadd %s871, %s981
          %s983 = smul.addr %s31, 16
          %s984 = scalar_lea.hbm %s8, %s983
          %s986 = sshll.u32 %s873, 4
          %s987 = int_to_ptr.vmem [resolvable:$true] %s986
          %989 = dma.vmem_to_hbm [thread:$0]  %s987, 16, %s984, %s871
        $region98: #{_lambda_.1} parent=47 // pred_fallthru
          _
        // Predicated region
        $region99: #{_lambda_.1} parent=47 // pred_check
          %p990 = pneg %p265
        $region100: #{_lambda_.1} parent=47 // pred_check_branch
          %992 = sbr.rel (%p990) target = $region102
        $region101: #{_lambda_.1} parent=47 // pred_region
          %s994 = ssub.s32 16, 16
          %995 = vsyncadd %s875, %s994
          %s996 = smul.addr %s31, 16
          %s997 = scalar_lea.hbm %s9, %s996
          %s999 = sshll.u32 %s877, 4
          %s1000 = int_to_ptr.vmem [resolvable:$true] %s999
          %1002 = dma.vmem_to_hbm [thread:$0]  %s1000, 16, %s997, %s875
        $region102: #{_lambda_.1} parent=47 // pred_fallthru
          _
      $region48: #{_lambda_.1} parent=5 // pred_fallthru
        _
      %p1003 = scmp.le.s32.totalorder 2, %s22
      // Predicated region
      $region103: #{_lambda_.1} parent=5 // pred_check
        %p1004 = pneg %p1003
      $region104: #{_lambda_.1} parent=5 // pred_check_branch
        %1006 = sbr.rel (%p1004) target = $region106
      $region105: #{_lambda_.1} parent=5 // pred_region
        %s1007 = ssub.s32 %s22, 2
        // Predicated region
        $region107: #{_lambda_.1} parent=105 // pred_check
          %p1008 = pneg %p219
        $region108: #{_lambda_.1} parent=105 // pred_check_branch
          %1010 = sbr.rel (%p1008) target = $region110
        $region109: #{_lambda_.1} parent=105 // pred_region
          %s1011 = sand.u32 %s204, 1
          %s1012 = sand.u32 %s204, 1
          %s1013 = smul.addr %s1012, 128
          %s1014 = scalar_lea.vmem [#allocation3], %s1013
        $region110: #{_lambda_.1} parent=105 // pred_fallthru
          _
        // Predicated region
        $region111: #{_lambda_.1} parent=105 // pred_check
          %p1015 = pneg %p245
        $region112: #{_lambda_.1} parent=105 // pred_check_branch
          %1017 = sbr.rel (%p1015) target = $region114
        $region113: #{_lambda_.1} parent=105 // pred_region
          %s1018 = sand.u32 %s230, 1
          %s1019 = scalar_lea.sflag [#allocation5], %s1018
          %s1020 = sand.u32 %s230, 1
          %s1021 = scalar_lea.vmem [#allocation4], %s1020
          %1022 = dma.done %s1019, 16
        $region114: #{_lambda_.1} parent=105 // pred_fallthru
          _
        // Predicated region
        $region115: #{_lambda_.1} parent=105 // pred_check
          %p1023 = pneg %p271
        $region116: #{_lambda_.1} parent=105 // pred_check_branch
          %1025 = sbr.rel (%p1023) target = $region118
        $region117: #{_lambda_.1} parent=105 // pred_region
          %s1026 = sand.u32 %s256, 1
          %s1027 = scalar_lea.sflag [#allocation7], %s1026
          %s1028 = sand.u32 %s256, 1
          %s1029 = scalar_lea.vmem [#allocation6], %s1028
          %1030 = dma.done %s1027, 16
        $region118: #{_lambda_.1} parent=105 // pred_fallthru
          _
      $region106: #{_lambda_.1} parent=5 // pred_fallthru
        _
    $region6: #{_lambda_.1} parent=1 // loop_footer
      %s26 = sadd.s32 1, %s22
    $region7: #{_lambda_.1} parent=1 // loop_footer_branch
      %21 = sbr.rel target = $region3
    $region8: #{_lambda_.1} parent=1 // loop_exit
      _
    %1031 = vsyncpa [#allocation5], 1
    %s1032 = scalar_lea.sflag [#allocation5], 1
    %1033 = vsyncpa %s1032, 1
    %1034 = vsyncpa [#allocation7], 1
    %s1035 = scalar_lea.sflag [#allocation7], 1
    %1036 = vsyncpa %s1035, 1

</llo_original>
